<compile_context>
chip_gen: v5e
topology: v5e:2x2
jax: 0.10.0
libtpu: 0.0.40
codegen_flags: <defaults>
</compile_context>

<pallas_src>
import jax
import jax.numpy as jnp
from jax.experimental import pallas as pl
from jax.experimental.pallas import tpu as pltpu


_MIN_TB = 512            # smallest batch tile once we tile at all
_MAX_TB = 4096           # largest batch tile (double-buffered blocks ~= few MiB)
_SMALL_BATCH_XLA = 1024  # below this, plain XLA fusion beats kernel launch


def _round_up(x, m):
    return ((x + m - 1) // m) * m


def _pick_tb(B):
    """Batch rows per grid step.

    Keeps >= 4 grid steps at large B (so v7x's two TensorCores both get work on
    the 'parallel' axis) while staying within [_MIN_TB, _MAX_TB]; tiles are
    multiples of 8 rows (f32 sublane).
    """
    if B <= _MIN_TB:
        return _round_up(B, 8)
    tb = _round_up(-(-B // 4), 8)          # cdiv(B, 4) rounded to sublane
    return int(min(_MAX_TB, max(_MIN_TB, tb)))


def _bernoulli_logits_kernel(x_ref, wt_ref, b_ref, logits_ref):
    # In-kernel bf16 cast (halves MXU input width, f32 accumulation) + f32 bias.
    x_bf = x_ref[...].astype(jnp.bfloat16)
    acc = jnp.dot(x_bf, wt_ref[...], preferred_element_type=jnp.float32)
    logits_ref[...] = acc + b_ref[...]


def prepare_bernoulli_params(weight, bias):
    """One-time parameter prep, hoisted out of the per-call hot path.

    weight: (num_outputs, num_inputs) f32 (PyTorch nn.Linear layout)
    bias:   (num_outputs,) f32
    Returns (wt, b_row): (I, O) bf16 and (1, O) f32.
    """
    wt = jnp.asarray(weight).T.astype(jnp.bfloat16)
    b_row = jnp.asarray(bias).astype(jnp.float32).reshape(1, -1)
    return wt, b_row


@jax.jit
def _bernoulli_head_pallas(x, wt, b_row):
    B, I = x.shape
    O = wt.shape[1]
    TB = _pick_tb(B)
    grid = (pl.cdiv(B, TB),)   # ragged final block: Pallas masks its writes

    cost = pl.CostEstimate(
        flops=2 * B * I * O,
        transcendentals=0,
        bytes_accessed=x.size * 4 + wt.size * 2 + b_row.size * 4 + B * O * 4,
    )

    return pl.pallas_call(
        _bernoulli_logits_kernel,
        out_shape=jax.ShapeDtypeStruct((B, O), jnp.float32),
        grid=grid,
        in_specs=[
            pl.BlockSpec((TB, I), lambda i: (i, 0)),   # batch-tiled activations (f32)
            pl.BlockSpec((I, O), lambda i: (0, 0)),    # resident bf16 weight
            pl.BlockSpec((1, O), lambda i: (0, 0)),    # resident f32 bias row
        ],
        out_specs=pl.BlockSpec((TB, O), lambda i: (i, 0)),
        compiler_params=pltpu.CompilerParams(
            dimension_semantics=("parallel",),         # megacore-shardable batch axis
        ),
        cost_estimate=cost,
    )(x, wt, b_row)


@jax.jit
def _bernoulli_head_xla(x, wt, b_row):
    # Small-batch fast path: same math, let XLA fuse it.
    return jnp.dot(x.astype(jnp.bfloat16), wt,
                   preferred_element_type=jnp.float32) + b_row


def bernoulli_head(x, wt, b_row, *, force_kernel=False):
    """logits = x @ W^T + b. Dispatches Pallas kernel vs. plain XLA by batch."""
    if (not force_kernel) and x.shape[0] < _SMALL_BATCH_XLA:
        return _bernoulli_head_xla(x, wt, b_row)
    return _bernoulli_head_pallas(x, wt, b_row)


class FixedBernoulliJax:
    """JAX mirror of FixedBernoulli, parameterized by logits only.

    probs / mode / entropy / log_prob are cheap elementwise ops fused by XLA
    into their consumers, so they never round-trip through HBM from the kernel.
    """

    def __init__(self, logits):
        self.logits = logits

    @property
    def probs(self):
        return jax.nn.sigmoid(self.logits)

    def mode(self):
        # probs > 0.5  <=>  logits > 0
        return (self.logits > 0.0).astype(jnp.float32)

    def entropy(self):
        p = jax.nn.sigmoid(self.logits)
        ent = -(p * jax.nn.log_sigmoid(self.logits)
                + (1.0 - p) * jax.nn.log_sigmoid(-self.logits))
        return ent.sum(-1)

    def log_probs(self, actions):
        lp = (actions * jax.nn.log_sigmoid(self.logits)
              + (1.0 - actions) * jax.nn.log_sigmoid(-self.logits))
        return lp.reshape(actions.shape[0], -1).sum(-1)[:, None]


def orthogonal_init(key, shape, gain):
    """Deterministic orthogonal init (matches nn.init.orthogonal_ semantics)."""
    rows, cols = shape
    flat = jax.random.normal(key, (max(rows, cols), min(rows, cols)), jnp.float32)
    q, r = jnp.linalg.qr(flat)
    sign = jnp.sign(jnp.diag(r))
    sign = jnp.where(sign == 0, 1.0, sign)
    q = q * sign
    if rows < cols:
        q = q.T
    return gain * q[:rows, :cols]


if __name__ == "__main__":
    # Small shapes consistent with Bernoulli(num_inputs, num_outputs)
    batch, num_inputs, num_outputs = 8, 32, 8
    gain = 0.01

    key = jax.random.PRNGKey(0)
    kx, kw, kx2 = jax.random.split(key, 3)

    x = jax.random.normal(kx, (batch, num_inputs), jnp.float32)
    weight = orthogonal_init(kw, (num_outputs, num_inputs), gain)   # use_orthogonal=True
    bias = jnp.zeros((num_outputs,), jnp.float32)                   # constant_(x, 0)

    # One-time param prep (hoisted out of the per-call hot path).
    wt, b_row = prepare_bernoulli_params(weight, bias)

    # 1) Force the Pallas kernel path at the small deployed shape.
    logits = bernoulli_head(x, wt, b_row, force_kernel=True)
    dist = FixedBernoulliJax(logits)
    jax.block_until_ready((dist.logits, dist.probs, dist.mode(), dist.entropy()))

    ref_logits = x @ weight.T + bias
    assert logits.shape == ref_logits.shape
    assert jnp.allclose(logits, ref_logits, atol=1e-3, rtol=1e-2)
    assert jnp.allclose(dist.probs, jax.nn.sigmoid(ref_logits), atol=1e-3, rtol=1e-2)
    assert jnp.allclose(dist.mode(),
                        (jax.nn.sigmoid(ref_logits) > 0.5).astype(jnp.float32))

    # 2) Large ragged batch: multi-step grid (>= 4 steps), partial final block.
    x_big = jax.random.normal(kx2, (4100, num_inputs), jnp.float32)
    logits_big = bernoulli_head(x_big, wt, b_row)       # dispatches to Pallas
    jax.block_until_ready(logits_big)
    ref_big = x_big @ weight.T + bias
    assert logits_big.shape == ref_big.shape
    assert jnp.allclose(logits_big, ref_big, atol=1e-3, rtol=1e-2)

    # 3) Small-batch XLA fast path (kernel bypass) stays consistent.
    logits_xla = bernoulli_head(x, wt, b_row)
    jax.block_until_ready(logits_xla)
    assert jnp.allclose(logits_xla, ref_logits, atol=1e-3, rtol=1e-2)

    print("KERNEL_OK")
</pallas_src>

<mosaic_0001>
module attributes {stable_mosaic.version = 11 : i64} {
  func.func @_bernoulli_logits_kernel(%arg0: i32, %arg1: memref<8x32xf32, #tpu.memory_space<vmem>>, %arg2: memref<32x8xbf16, #tpu.memory_space<vmem>>, %arg3: memref<1x8xf32, #tpu.memory_space<vmem>>, %arg4: memref<8x8xf32, #tpu.memory_space<vmem>>) attributes {dimension_semantics = [#tpu.dimension_semantics<parallel>], iteration_bounds = array<i64: 1>, scalar_prefetch = 0 : i64, scratch_operands = 0 : i64, tpu.core_type = #tpu.core_type<tc>, window_params = [{transform_indices = @transform_0, window_bounds = array<i64: 8, 32>}, {pipeline_mode = #tpu.pipeline_mode<synchronous>, transform_indices = @transform_1, window_bounds = array<i64: 32, 8>}, {pipeline_mode = #tpu.pipeline_mode<synchronous>, transform_indices = @transform_2, window_bounds = array<i64: 1, 8>}, {transform_indices = @transform_3, window_bounds = array<i64: 8, 8>}]} {
    %c0 = arith.constant 0 : index
    %c0_0 = arith.constant 0 : index
    %0 = vector.load %arg1[%c0, %c0_0] : memref<8x32xf32, #tpu.memory_space<vmem>>, vector<8x32xf32>
    %1 = arith.truncf %0 : vector<8x32xf32> to vector<8x32xbf16>
    %c0_1 = arith.constant 0 : index
    %c0_2 = arith.constant 0 : index
    %2 = vector.load %arg2[%c0_1, %c0_2] : memref<32x8xbf16, #tpu.memory_space<vmem>>, vector<32x8xbf16>
    %cst = arith.constant dense<0.000000e+00> : vector<8x8xf32>
    %3 = tpu.matmul %1, %2, %cst {dimension_numbers = #tpu.dot_dimension_numbers<[1], [0], [0], [1], [0, 0, 1, 1], [], []>} : vector<8x32xbf16>, vector<32x8xbf16>, vector<8x8xf32> -> vector<8x8xf32>
    %c0_3 = arith.constant 0 : index
    %c0_4 = arith.constant 0 : index
    %4 = vector.load %arg3[%c0_3, %c0_4] : memref<1x8xf32, #tpu.memory_space<vmem>>, vector<1x8xf32>
    %5 = vector.broadcast %4 : vector<1x8xf32> to vector<8x8xf32>
    %6 = arith.addf %3, %5 : vector<8x8xf32>
    %c0_5 = arith.constant 0 : index
    %c0_6 = arith.constant 0 : index
    %7 = vector.load %arg4[%c0_5, %c0_6] : memref<8x8xf32, #tpu.memory_space<vmem>>, vector<8x8xf32>
    tpu.vector_store %arg4[%c0_5, %c0_6], %6 {strides = array<i32>} : memref<8x8xf32, #tpu.memory_space<vmem>>, vector<8x8xf32>,
    return
  }
  func.func @transform_0(%arg0: i32) -> (i32, i32) {
    %c0_i32 = arith.constant 0 : i32
    %c0_i32_0 = arith.constant 0 : i32
    return %arg0, %c0_i32 : i32, i32
  }
  func.func @transform_1(%arg0: i32) -> (i32, i32) {
    %c0_i32 = arith.constant 0 : i32
    %c0_i32_0 = arith.constant 0 : i32
    %c0_i32_1 = arith.constant 0 : i32
    return %c0_i32, %c0_i32_0 : i32, i32
  }
  func.func @transform_2(%arg0: i32) -> (i32, i32) {
    %c0_i32 = arith.constant 0 : i32
    %c0_i32_0 = arith.constant 0 : i32
    %c0_i32_1 = arith.constant 0 : i32
    return %c0_i32, %c0_i32_0 : i32, i32
  }
  func.func @transform_3(%arg0: i32) -> (i32, i32) {
    %c0_i32 = arith.constant 0 : i32
    %c0_i32_0 = arith.constant 0 : i32
    return %arg0, %c0_i32 : i32, i32
  }
}

</mosaic_0001>

<llo_original>
// kernel: _bernoulli_head_pallas.1
$region0: #{_bernoulli_head_pallas.1}
  #allocation0 [shape = 'u32[]', space=smem, size = 0x4, offset = 0x4, fixed_abs, tag = 'smem constant byte address 0x4 - core index']
  #allocation1 [shape = 'u32[72,128]{1,0:T(1,128)}', space=vmem, size = 0x9000, scoped, tag = 'internal scratch']
  %s0 = inlined_call_operand.vmem [shape: f32[8,32], index: 0, kind: input, shape index: {}]
  %s1 = inlined_call_operand.vmem [shape: bf16[32,8], index: 1, kind: input, shape index: {}]
  %s2 = inlined_call_operand.vmem [shape: f32[1,8], index: 2, kind: input, shape index: {}]
  %s3 = inlined_call_operand.hbm [shape: f32[8,8], index: 3, kind: output, shape index: {}]
  %s4 = sld [smem:[#allocation0]]
  $region22: #{_bernoulli_head_pallas.1} parent=0
    _
  %s6 = ssub.s32 1, %s4
  %s7 = scalar_select 0, %s6, %s4
  $region1: #{_bernoulli_head_pallas.1} parent=0
    #allocation2 [shape = 'u8[4096]{0}', space=vmem, size = 0x1000, scoped, tag = 'output window, operand 0, single buffered']
    #allocation3 [shape = 's32[1]{0}', space=sflag, size = 0x4, scoped, tag = 'scoped memory for _bernoulli_head_pallas.1']
    %8 = vsyncpa [#allocation3], 0
    // Predicated region
    $region2: #{_bernoulli_head_pallas.1} parent=1 // pred_check
      _
    $region3: #{_bernoulli_head_pallas.1} parent=1 // pred_check_branch
      %10 = sbr.rel (0) target = $region5
    $region4: #{_bernoulli_head_pallas.1} parent=1 // pred_region
      _
    $region5: #{_bernoulli_head_pallas.1} parent=1 // pred_fallthru
      _
    // Predicated region
    $region6: #{_bernoulli_head_pallas.1} parent=1 // pred_check
      _
    $region7: #{_bernoulli_head_pallas.1} parent=1 // pred_check_branch
      %12 = sbr.rel (0) target = $region9
    $region8: #{_bernoulli_head_pallas.1} parent=1 // pred_region
      _
    $region9: #{_bernoulli_head_pallas.1} parent=1 // pred_fallthru
      _
    // Predicated region
    $region10: #{_bernoulli_head_pallas.1} parent=1 // pred_check
      _
    $region11: #{_bernoulli_head_pallas.1} parent=1 // pred_check_branch
      %14 = sbr.rel (0) target = $region13
    $region12: #{_bernoulli_head_pallas.1} parent=1 // pred_region
      _
    $region13: #{_bernoulli_head_pallas.1} parent=1 // pred_fallthru
      _
    %v16 = vld [vmem:[%s0] sm:$0xff]
    %v17 = vpack.c.bf16 %v16, %v16
    %v18 = vld [vmem:[%s1] sm:$0xf]
    %v19 = vld [vmem:[%s1 + $0x4] sm:$0xf]
    %v20 = vld [vmem:[%s1 + $0x8] sm:$0xf]
    %v21 = vld [vmem:[%s1 + $0xc] sm:$0xf]
    %v22 = vld [vmem:[%s2] sm:$0x1]
    %v24 = vperm.slane %v22, 0
    %v30 = vunpack.c.l.b16 %v18
    %v31 = vunpack.c.l.b16 %v19
    %v32 = vunpack.c.l.b16 %v20
    %v33 = vunpack.c.l.b16 %v21
    %v34 = vpack.c.b16 %v31, %v30
    %v35 = vpack.c.b16 %v33, %v32
    %vm38 = vcmask 261120
    %v40 = vsel %vm38, %v17, 0
    %42 = vmatpush.bf16.msra.mxu0 0
    %43 = vmatpush.bf16.msra.mxu0 0
    %44 = vmatpush.bf16.msra.mxu0 0
    %45 = vmatpush.bf16.msra.mxu0 0
    %46 = vmatpush.bf16.msra.mxu0 0
    %47 = vmatpush.bf16.msra.mxu0 0
    %48 = vmatpush.bf16.msra.mxu0 %v35
    %49 = vmatpush.bf16.msra.mxu0 %v34
    %50 = vmatmul.bf16.gmra.mxu0 %v40
    %v51 = vpop.f32.mrf.mxu0
    %v52 = vadd.f32 %v24, %v51
    %v53 = vpop.f32.mrf.mxu0
    %54 = vdwg.mxu0
    %vm55 = vcmask 64512
    %56 = vst.msk [vmem:[#allocation2] sm:$0xff] %vm55, %v52
    // Predicated region
    $region14: #{_bernoulli_head_pallas.1} parent=1 // pred_check
      _
    $region15: #{_bernoulli_head_pallas.1} parent=1 // pred_check_branch
      %58 = sbr.rel (0) target = $region17
    $region16: #{_bernoulli_head_pallas.1} parent=1 // pred_region
      %60 = vsyncadd [#allocation3], 0
      %s62 = sshll.u32 [#allocation2], 4
      %s63 = int_to_ptr.vmem [resolvable:$true] %s62
      %s64 = sshll.u32 %s3, 4
      %s65 = int_to_ptr.hbm [resolvable:$true] %s64
      %67 = dma.vmem_to_hbm [thread:$0]  %s63, 128, %s65, [#allocation3]
    $region17: #{_bernoulli_head_pallas.1} parent=1 // pred_fallthru
      _
    // Predicated region
    $region18: #{_bernoulli_head_pallas.1} parent=1 // pred_check
      _
    $region19: #{_bernoulli_head_pallas.1} parent=1 // pred_check_branch
      %69 = sbr.rel (0) target = $region21
    $region20: #{_bernoulli_head_pallas.1} parent=1 // pred_region
      %71 = dma.done [#allocation3], 128
    $region21: #{_bernoulli_head_pallas.1} parent=1 // pred_fallthru
      _
    %72 = vsyncpa [#allocation3], 1

</llo_original>
